<compile_context>
chip_gen: v5e
topology: v5e:2x2
jax: 0.10.0
libtpu: 0.0.40
codegen_flags: <defaults>
</compile_context>

<pallas_src>
import math
import functools

import jax
import jax.numpy as jnp
from jax import lax
from jax.experimental import pallas as pl
from jax.experimental.pallas import tpu as pltpu


# Contract last dim of x with last dim of w  ==  x @ w.T  (no transpose op emitted,
# PyTorch (out_features, in_features) weights are consumed as-is).
_DN_XT = (((1,), (1,)), ((), ()))


def mha_kernel(q_ref, k_ref, v_ref, wqkv_ref, bqkv_ref, wo_ref, bo_ref, o_ref, ctx_ref,
               *, nhead, scale):
    Bc, Lq, D = q_ref.shape
    _, Lk, _ = k_ref.shape
    d_k = D // nhead

    # Flatten the chunk's batch into the row (sublane) dim so the projections run as
    # (Bc*L, D) x (D, D) matmuls: bigger M, fewer tiny MXU pushes, one grid step does
    # the whole chunk's work.  (Leading-dim collapse only; lane dim stays d_model.)
    q = q_ref[...].reshape(Bc * Lq, D)
    k = k_ref[...].reshape(Bc * Lk, D)
    v = v_ref[...].reshape(Bc * Lk, D)

    # Q/K/V projections.  1/sqrt(d_k) is folded into Q once here instead of scaling
    # every (Lq, Lk) score tile per head.  NOTE: for pure self-attention (q is k is v)
    # these three dots could fuse into a single (R, D) x (D, 3D) pass; the module's
    # general (query, key, value) signature keeps them separate.
    Q = (lax.dot_general(q, wqkv_ref[0], _DN_XT, preferred_element_type=jnp.float32)
         + bqkv_ref[0:1, :]) * scale                                   # (Bc*Lq, D) f32
    K = (lax.dot_general(k, wqkv_ref[1], _DN_XT, preferred_element_type=jnp.float32)
         + bqkv_ref[1:2, :])                                           # (Bc*Lk, D) f32
    V = (lax.dot_general(v, wqkv_ref[2], _DN_XT, preferred_element_type=jnp.float32)
         + bqkv_ref[2:3, :])                                           # (Bc*Lk, D) f32

    # Per-(batch-in-chunk, head) attention.  Heads are static d_k-wide lane slices; each
    # head's context goes straight into the VMEM scratch `ctx_ref` at its lane slice
    # (no jnp.concatenate / head merge copies).
    for b in range(Bc):                                 # static unroll, Bc is tiny
        qs = slice(b * Lq, (b + 1) * Lq)
        ks = slice(b * Lk, (b + 1) * Lk)
        for h in range(nhead):                          # static unroll
            cs = slice(h * d_k, (h + 1) * d_k)
            s = lax.dot_general(Q[qs, cs], K[ks, cs], _DN_XT,
                                preferred_element_type=jnp.float32)    # (Lq, Lk)
            s = s - jnp.max(s, axis=-1, keepdims=True)
            p = jnp.exp(s)
            p = p / jnp.sum(p, axis=-1, keepdims=True)  # exact softmax (no approx recip)
            # TODO(synk): training-mode attention dropout would mask `p` here.
            ctx_ref[qs, cs] = jnp.dot(p, V[ks, cs],
                                      preferred_element_type=jnp.float32)

    # Single output projection over the whole chunk slab.
    ctx = ctx_ref[...].astype(wo_ref.dtype)
    out = lax.dot_general(ctx, wo_ref[...], _DN_XT,
                          preferred_element_type=jnp.float32) + bo_ref[...]
    # NOTE: with d_model < 128 lanes this store is masked; a lane-dense flattened
    # (1, Bc*Lq*d_model) out_spec would avoid that but costs an in-kernel relayout --
    # left as-is (measure first) since d_model=32 here.
    o_ref[...] = out.reshape(Bc, Lq, D).astype(o_ref.dtype)


def prepare_params(params, dtype=jnp.float32):
    """One-time parameter packing (hoisted out of the per-forward path).

    Use dtype=jnp.bfloat16 on v6e/v7x for large d_model (MXU peak is bf16; halves
    weight VMEM/HBM traffic).  Biases stay f32 (added to f32 accumulators).
    """
    return {
        "w_qkv": jnp.stack([params["w_q"], params["w_k"], params["w_v"]]).astype(dtype),  # (3,D,D)
        "b_qkv": jnp.stack([params["b_q"], params["b_k"], params["b_v"]]).astype(jnp.float32),  # (3,D)
        "w_o": params["w_o"].astype(dtype),                                                # (D,D)
        "b_o": params["b_o"].reshape(1, -1).astype(jnp.float32),                           # (1,D)
    }


def multi_head_attention(query, key, value, prepared, nhead, *, num_chunks=None):
    """query/key/value: (B, L, d_model) -> (B, Lq, d_model) float32."""
    B, Lq, D = query.shape
    _, Lk, _ = key.shape
    assert value.shape[1] == Lk, "key/value sequence lengths must match"
    assert D % nhead == 0
    d_k = D // nhead
    scale = 1.0 / math.sqrt(d_k)

    # Batch is processed in a small number of chunks rather than one grid step per batch
    # element: removes most ~0.35us per-step overheads and gives bigger matmul slabs.
    # Default 2 chunks keeps both v7x TensorCores busy via the "parallel" grid axis;
    # on single-TC v5e/v6e, num_chunks=1 removes the remaining step overhead.
    if num_chunks is None:
        num_chunks = 2 if (B >= 2 and B % 2 == 0) else 1
    assert B % num_chunks == 0
    Bc = B // num_chunks

    compute_dtype = prepared["w_qkv"].dtype
    q = query.astype(compute_dtype)
    k = key.astype(compute_dtype)
    v = value.astype(compute_dtype)

    kern = functools.partial(mha_kernel, nhead=nhead, scale=scale)
    return pl.pallas_call(
        kern,
        out_shape=jax.ShapeDtypeStruct((B, Lq, D), jnp.float32),
        grid=(num_chunks,),
        in_specs=[
            pl.BlockSpec((Bc, Lq, D), lambda c: (c, 0, 0)),   # query chunk
            pl.BlockSpec((Bc, Lk, D), lambda c: (c, 0, 0)),   # key chunk
            pl.BlockSpec((Bc, Lk, D), lambda c: (c, 0, 0)),   # value chunk
            # Weights stay resident (constant index_map).  For large d_model on v7x use
            # bf16 + single-buffering (pipeline_mode=pl.Buffered(1)) to fit 64 MiB VMEM.
            pl.BlockSpec((3, D, D), lambda c: (0, 0, 0)),     # stacked Wq/Wk/Wv
            pl.BlockSpec((3, D), lambda c: (0, 0)),           # stacked bq/bk/bv
            pl.BlockSpec((D, D), lambda c: (0, 0)),           # Wo
            pl.BlockSpec((1, D), lambda c: (0, 0)),           # bo
        ],
        out_specs=pl.BlockSpec((Bc, Lq, D), lambda c: (c, 0, 0)),
        scratch_shapes=[pltpu.VMEM((Bc * Lq, D), jnp.float32)],   # per-chunk ctx slab
        compiler_params=pltpu.CompilerParams(
            dimension_semantics=("parallel",),   # chunks shard across v7x's 2 TCs
            vmem_limit_bytes=32 * 1024 * 1024,
        ),
    )(q, k, v, prepared["w_qkv"], prepared["b_qkv"], prepared["w_o"], prepared["b_o"])


# Pure-JAX reference for correctness checking (mirrors the PyTorch module, eval mode).
def reference_mha(query, key, value, params, nhead):
    B, Q_len, d_model = query.shape
    d_k = d_model // nhead
    lin = lambda x, w, b: x @ w.T + b
    Q = lin(query, params["w_q"], params["b_q"])
    K = lin(key, params["w_k"], params["b_k"])
    V = lin(value, params["w_v"], params["b_v"])
    Qh = Q.reshape(B, Q_len, nhead, d_k).transpose(0, 2, 1, 3)
    Kh = K.reshape(B, -1, nhead, d_k).transpose(0, 2, 1, 3)
    Vh = V.reshape(B, -1, nhead, d_k).transpose(0, 2, 1, 3)
    scores = jnp.einsum("bhqd,bhkd->bhqk", Qh, Kh) / math.sqrt(d_k)
    attn = jax.nn.softmax(scores, axis=-1)
    out = jnp.einsum("bhqk,bhkd->bhqd", attn, Vh)
    out = out.transpose(0, 2, 1, 3).reshape(B, Q_len, d_model)
    return lin(out, params["w_o"], params["b_o"])


if __name__ == "__main__":
    d_model, nhead = 32, 4
    B, L = 2, 8

    key0 = jax.random.PRNGKey(0)
    keys = jax.random.split(key0, 12)

    bound = 1.0 / math.sqrt(d_model)   # PyTorch nn.Linear default init range
    u = lambda k, shape: jax.random.uniform(k, shape, jnp.float32, -bound, bound)
    params = {
        "w_q": u(keys[0], (d_model, d_model)), "b_q": u(keys[1], (d_model,)),
        "w_k": u(keys[2], (d_model, d_model)), "b_k": u(keys[3], (d_model,)),
        "w_v": u(keys[4], (d_model, d_model)), "b_v": u(keys[5], (d_model,)),
        "w_o": u(keys[6], (d_model, d_model)), "b_o": u(keys[7], (d_model,)),
    }
    prepared = prepare_params(params)   # done once, not per forward (f32 for the demo)

    query = jax.random.normal(keys[8], (B, L, d_model), jnp.float32)
    key_in = jax.random.normal(keys[9], (B, L, d_model), jnp.float32)
    value = jax.random.normal(keys[10], (B, L, d_model), jnp.float32)

    out = multi_head_attention(query, key_in, value, prepared, nhead)
    out = jax.block_until_ready(out)

    ref = reference_mha(query, key_in, value, params, nhead)
    assert out.shape == (B, L, d_model)
    # Exact softmax divide + f32 accumulation -> tight agreement with the reference.
    assert jnp.allclose(out, ref, atol=1e-4, rtol=1e-4), "mismatch vs reference"

    print("KERNEL_OK")
</pallas_src>

<mosaic_0001>
module attributes {stable_mosaic.version = 11 : i64} {
  func.func @mha_kernel(%arg0: i32, %arg1: memref<1x8x32xf32, #tpu.memory_space<vmem>>, %arg2: memref<1x8x32xf32, #tpu.memory_space<vmem>>, %arg3: memref<1x8x32xf32, #tpu.memory_space<vmem>>, %arg4: memref<3x32x32xf32, #tpu.memory_space<vmem>>, %arg5: memref<3x32xf32, #tpu.memory_space<vmem>>, %arg6: memref<32x32xf32, #tpu.memory_space<vmem>>, %arg7: memref<1x32xf32, #tpu.memory_space<vmem>>, %arg8: memref<1x8x32xf32, #tpu.memory_space<vmem>>, %arg9: memref<8x32xf32, #tpu.memory_space<vmem>>) attributes {dimension_semantics = [#tpu.dimension_semantics<parallel>], iteration_bounds = array<i64: 2>, scalar_prefetch = 0 : i64, scratch_operands = 1 : i64, tpu.core_type = #tpu.core_type<tc>, window_params = [{transform_indices = @transform_0, window_bounds = array<i64: 1, 8, 32>}, {transform_indices = @transform_1, window_bounds = array<i64: 1, 8, 32>}, {transform_indices = @transform_2, window_bounds = array<i64: 1, 8, 32>}, {pipeline_mode = #tpu.pipeline_mode<synchronous>, transform_indices = @transform_3, window_bounds = array<i64: 3, 32, 32>}, {pipeline_mode = #tpu.pipeline_mode<synchronous>, transform_indices = @transform_4, window_bounds = array<i64: 3, 32>}, {pipeline_mode = #tpu.pipeline_mode<synchronous>, transform_indices = @transform_5, window_bounds = array<i64: 32, 32>}, {pipeline_mode = #tpu.pipeline_mode<synchronous>, transform_indices = @transform_6, window_bounds = array<i64: 1, 32>}, {transform_indices = @transform_7, window_bounds = array<i64: 1, 8, 32>}]} {
    %c0 = arith.constant 0 : index
    %c0_0 = arith.constant 0 : index
    %c0_1 = arith.constant 0 : index
    %0 = vector.load %arg1[%c0, %c0_0, %c0_1] : memref<1x8x32xf32, #tpu.memory_space<vmem>>, vector<1x8x32xf32>
    %1 = vector.shape_cast %0 : vector<1x8x32xf32> to vector<8x32xf32>
    %c0_2 = arith.constant 0 : index
    %c0_3 = arith.constant 0 : index
    %c0_4 = arith.constant 0 : index
    %2 = vector.load %arg2[%c0_2, %c0_3, %c0_4] : memref<1x8x32xf32, #tpu.memory_space<vmem>>, vector<1x8x32xf32>
    %3 = vector.shape_cast %2 : vector<1x8x32xf32> to vector<8x32xf32>
    %c0_5 = arith.constant 0 : index
    %c0_6 = arith.constant 0 : index
    %c0_7 = arith.constant 0 : index
    %4 = vector.load %arg3[%c0_5, %c0_6, %c0_7] : memref<1x8x32xf32, #tpu.memory_space<vmem>>, vector<1x8x32xf32>
    %5 = vector.shape_cast %4 : vector<1x8x32xf32> to vector<8x32xf32>
    %c0_8 = arith.constant 0 : index
    %c0_9 = arith.constant 0 : index
    %c0_10 = arith.constant 0 : index
    %6 = vector.load %arg4[%c0_8, %c0_9, %c0_10] : memref<3x32x32xf32, #tpu.memory_space<vmem>>, vector<1x32x32xf32>
    %7 = vector.shape_cast %6 : vector<1x32x32xf32> to vector<32x32xf32>
    %cst = arith.constant dense<0.000000e+00> : vector<8x32xf32>
    %8 = tpu.matmul %1, %7, %cst {dimension_numbers = #tpu.dot_dimension_numbers<[1], [1], [0], [0], [0, 0, 1, 0], [], []>} : vector<8x32xf32>, vector<32x32xf32>, vector<8x32xf32> -> vector<8x32xf32>
    %c0_11 = arith.constant 0 : index
    %c0_12 = arith.constant 0 : index
    %9 = vector.load %arg5[%c0_11, %c0_12] : memref<3x32xf32, #tpu.memory_space<vmem>>, vector<1x32xf32>
    %10 = vector.broadcast %9 : vector<1x32xf32> to vector<8x32xf32>
    %11 = arith.addf %8, %10 : vector<8x32xf32>
    %cst_13 = arith.constant 0.353553385 : f32
    %12 = vector.broadcast %cst_13 : f32 to vector<8x32xf32>
    %13 = arith.mulf %11, %12 : vector<8x32xf32>
    %c1 = arith.constant 1 : index
    %c0_14 = arith.constant 0 : index
    %c0_15 = arith.constant 0 : index
    %14 = vector.load %arg4[%c1, %c0_14, %c0_15] : memref<3x32x32xf32, #tpu.memory_space<vmem>>, vector<1x32x32xf32>
    %15 = vector.shape_cast %14 : vector<1x32x32xf32> to vector<32x32xf32>
    %cst_16 = arith.constant dense<0.000000e+00> : vector<8x32xf32>
    %16 = tpu.matmul %3, %15, %cst_16 {dimension_numbers = #tpu.dot_dimension_numbers<[1], [1], [0], [0], [0, 0, 1, 0], [], []>} : vector<8x32xf32>, vector<32x32xf32>, vector<8x32xf32> -> vector<8x32xf32>
    %c1_17 = arith.constant 1 : index
    %c0_18 = arith.constant 0 : index
    %17 = vector.load %arg5[%c1_17, %c0_18] : memref<3x32xf32, #tpu.memory_space<vmem>>, vector<1x32xf32>
    %18 = vector.broadcast %17 : vector<1x32xf32> to vector<8x32xf32>
    %19 = arith.addf %16, %18 : vector<8x32xf32>
    %c2 = arith.constant 2 : index
    %c0_19 = arith.constant 0 : index
    %c0_20 = arith.constant 0 : index
    %20 = vector.load %arg4[%c2, %c0_19, %c0_20] : memref<3x32x32xf32, #tpu.memory_space<vmem>>, vector<1x32x32xf32>
    %21 = vector.shape_cast %20 : vector<1x32x32xf32> to vector<32x32xf32>
    %cst_21 = arith.constant dense<0.000000e+00> : vector<8x32xf32>
    %22 = tpu.matmul %5, %21, %cst_21 {dimension_numbers = #tpu.dot_dimension_numbers<[1], [1], [0], [0], [0, 0, 1, 0], [], []>} : vector<8x32xf32>, vector<32x32xf32>, vector<8x32xf32> -> vector<8x32xf32>
    %c2_22 = arith.constant 2 : index
    %c0_23 = arith.constant 0 : index
    %23 = vector.load %arg5[%c2_22, %c0_23] : memref<3x32xf32, #tpu.memory_space<vmem>>, vector<1x32xf32>
    %24 = vector.broadcast %23 : vector<1x32xf32> to vector<8x32xf32>
    %25 = arith.addf %22, %24 : vector<8x32xf32>
    %26 = vector.extract_strided_slice %13 {offsets = [0, 0], sizes = [8, 8], strides = [1, 1]} : vector<8x32xf32> to vector<8x8xf32>
    %27 = vector.extract_strided_slice %19 {offsets = [0, 0], sizes = [8, 8], strides = [1, 1]} : vector<8x32xf32> to vector<8x8xf32>
    %cst_24 = arith.constant dense<0.000000e+00> : vector<8x8xf32>
    %28 = tpu.matmul %26, %27, %cst_24 {dimension_numbers = #tpu.dot_dimension_numbers<[1], [1], [0], [0], [0, 0, 1, 0], [], []>} : vector<8x8xf32>, vector<8x8xf32>, vector<8x8xf32> -> vector<8x8xf32>
    %cst_25 = arith.constant dense<0xFF800000> : vector<8xf32>
    %29 = vector.multi_reduction <maximumf>, %28, %cst_25 [1] : vector<8x8xf32> to vector<8xf32>
    %30 = vector.shape_cast %29 : vector<8xf32> to vector<8x1xf32>
    %31 = vector.broadcast %30 : vector<8x1xf32> to vector<8x8xf32>
    %32 = arith.subf %28, %31 : vector<8x8xf32>
    %33 = math.exp %32 : vector<8x8xf32>
    %cst_26 = arith.constant dense<0.000000e+00> : vector<8xf32>
    %34 = vector.multi_reduction <add>, %33, %cst_26 [1] : vector<8x8xf32> to vector<8xf32>
    %35 = vector.shape_cast %34 : vector<8xf32> to vector<8x1xf32>
    %36 = vector.broadcast %35 : vector<8x1xf32> to vector<8x8xf32>
    %37 = arith.divf %33, %36 : vector<8x8xf32>
    %38 = vector.extract_strided_slice %25 {offsets = [0, 0], sizes = [8, 8], strides = [1, 1]} : vector<8x32xf32> to vector<8x8xf32>
    %cst_27 = arith.constant dense<0.000000e+00> : vector<8x8xf32>
    %39 = tpu.matmul %37, %38, %cst_27 {dimension_numbers = #tpu.dot_dimension_numbers<[1], [0], [0], [1], [0, 0, 1, 1], [], []>} : vector<8x8xf32>, vector<8x8xf32>, vector<8x8xf32> -> vector<8x8xf32>
    %c0_28 = arith.constant 0 : index
    %c0_29 = arith.constant 0 : index
    %40 = vector.load %arg9[%c0_28, %c0_29] : memref<8x32xf32, #tpu.memory_space<vmem>>, vector<8x8xf32>
    tpu.vector_store %arg9[%c0_28, %c0_29], %39 {strides = array<i32>} : memref<8x32xf32, #tpu.memory_space<vmem>>, vector<8x8xf32>,
    %41 = vector.extract_strided_slice %13 {offsets = [0, 8], sizes = [8, 8], strides = [1, 1]} : vector<8x32xf32> to vector<8x8xf32>
    %42 = vector.extract_strided_slice %19 {offsets = [0, 8], sizes = [8, 8], strides = [1, 1]} : vector<8x32xf32> to vector<8x8xf32>
    %cst_30 = arith.constant dense<0.000000e+00> : vector<8x8xf32>
    %43 = tpu.matmul %41, %42, %cst_30 {dimension_numbers = #tpu.dot_dimension_numbers<[1], [1], [0], [0], [0, 0, 1, 0], [], []>} : vector<8x8xf32>, vector<8x8xf32>, vector<8x8xf32> -> vector<8x8xf32>
    %cst_31 = arith.constant dense<0xFF800000> : vector<8xf32>
    %44 = vector.multi_reduction <maximumf>, %43, %cst_31 [1] : vector<8x8xf32> to vector<8xf32>
    %45 = vector.shape_cast %44 : vector<8xf32> to vector<8x1xf32>
    %46 = vector.broadcast %45 : vector<8x1xf32> to vector<8x8xf32>
    %47 = arith.subf %43, %46 : vector<8x8xf32>
    %48 = math.exp %47 : vector<8x8xf32>
    %cst_32 = arith.constant dense<0.000000e+00> : vector<8xf32>
    %49 = vector.multi_reduction <add>, %48, %cst_32 [1] : vector<8x8xf32> to vector<8xf32>
    %50 = vector.shape_cast %49 : vector<8xf32> to vector<8x1xf32>
    %51 = vector.broadcast %50 : vector<8x1xf32> to vector<8x8xf32>
    %52 = arith.divf %48, %51 : vector<8x8xf32>
    %53 = vector.extract_strided_slice %25 {offsets = [0, 8], sizes = [8, 8], strides = [1, 1]} : vector<8x32xf32> to vector<8x8xf32>
    %cst_33 = arith.constant dense<0.000000e+00> : vector<8x8xf32>
    %54 = tpu.matmul %52, %53, %cst_33 {dimension_numbers = #tpu.dot_dimension_numbers<[1], [0], [0], [1], [0, 0, 1, 1], [], []>} : vector<8x8xf32>, vector<8x8xf32>, vector<8x8xf32> -> vector<8x8xf32>
    %c0_34 = arith.constant 0 : index
    %c8 = arith.constant 8 : index
    %55 = vector.load %arg9[%c0_34, %c8] : memref<8x32xf32, #tpu.memory_space<vmem>>, vector<8x8xf32>
    tpu.vector_store %arg9[%c0_34, %c8], %54 {strides = array<i32>} : memref<8x32xf32, #tpu.memory_space<vmem>>, vector<8x8xf32>,
    %56 = vector.extract_strided_slice %13 {offsets = [0, 16], sizes = [8, 8], strides = [1, 1]} : vector<8x32xf32> to vector<8x8xf32>
    %57 = vector.extract_strided_slice %19 {offsets = [0, 16], sizes = [8, 8], strides = [1, 1]} : vector<8x32xf32> to vector<8x8xf32>
    %cst_35 = arith.constant dense<0.000000e+00> : vector<8x8xf32>
    %58 = tpu.matmul %56, %57, %cst_35 {dimension_numbers = #tpu.dot_dimension_numbers<[1], [1], [0], [0], [0, 0, 1, 0], [], []>} : vector<8x8xf32>, vector<8x8xf32>, vector<8x8xf32> -> vector<8x8xf32>
    %cst_36 = arith.constant dense<0xFF800000> : vector<8xf32>
    %59 = vector.multi_reduction <maximumf>, %58, %cst_36 [1] : vector<8x8xf32> to vector<8xf32>
    %60 = vector.shape_cast %59 : vector<8xf32> to vector<8x1xf32>
    %61 = vector.broadcast %60 : vector<8x1xf32> to vector<8x8xf32>
    %62 = arith.subf %58, %61 : vector<8x8xf32>
    %63 = math.exp %62 : vector<8x8xf32>
    %cst_37 = arith.constant dense<0.000000e+00> : vector<8xf32>
    %64 = vector.multi_reduction <add>, %63, %cst_37 [1] : vector<8x8xf32> to vector<8xf32>
    %65 = vector.shape_cast %64 : vector<8xf32> to vector<8x1xf32>
    %66 = vector.broadcast %65 : vector<8x1xf32> to vector<8x8xf32>
    %67 = arith.divf %63, %66 : vector<8x8xf32>
    %68 = vector.extract_strided_slice %25 {offsets = [0, 16], sizes = [8, 8], strides = [1, 1]} : vector<8x32xf32> to vector<8x8xf32>
    %cst_38 = arith.constant dense<0.000000e+00> : vector<8x8xf32>
    %69 = tpu.matmul %67, %68, %cst_38 {dimension_numbers = #tpu.dot_dimension_numbers<[1], [0], [0], [1], [0, 0, 1, 1], [], []>} : vector<8x8xf32>, vector<8x8xf32>, vector<8x8xf32> -> vector<8x8xf32>
    %c0_39 = arith.constant 0 : index
    %c16 = arith.constant 16 : index
    %70 = vector.load %arg9[%c0_39, %c16] : memref<8x32xf32, #tpu.memory_space<vmem>>, vector<8x8xf32>
    tpu.vector_store %arg9[%c0_39, %c16], %69 {strides = array<i32>} : memref<8x32xf32, #tpu.memory_space<vmem>>, vector<8x8xf32>,
    %71 = vector.extract_strided_slice %13 {offsets = [0, 24], sizes = [8, 8], strides = [1, 1]} : vector<8x32xf32> to vector<8x8xf32>
    %72 = vector.extract_strided_slice %19 {offsets = [0, 24], sizes = [8, 8], strides = [1, 1]} : vector<8x32xf32> to vector<8x8xf32>
    %cst_40 = arith.constant dense<0.000000e+00> : vector<8x8xf32>
    %73 = tpu.matmul %71, %72, %cst_40 {dimension_numbers = #tpu.dot_dimension_numbers<[1], [1], [0], [0], [0, 0, 1, 0], [], []>} : vector<8x8xf32>, vector<8x8xf32>, vector<8x8xf32> -> vector<8x8xf32>
    %cst_41 = arith.constant dense<0xFF800000> : vector<8xf32>
    %74 = vector.multi_reduction <maximumf>, %73, %cst_41 [1] : vector<8x8xf32> to vector<8xf32>
    %75 = vector.shape_cast %74 : vector<8xf32> to vector<8x1xf32>
    %76 = vector.broadcast %75 : vector<8x1xf32> to vector<8x8xf32>
    %77 = arith.subf %73, %76 : vector<8x8xf32>
    %78 = math.exp %77 : vector<8x8xf32>
    %cst_42 = arith.constant dense<0.000000e+00> : vector<8xf32>
    %79 = vector.multi_reduction <add>, %78, %cst_42 [1] : vector<8x8xf32> to vector<8xf32>
    %80 = vector.shape_cast %79 : vector<8xf32> to vector<8x1xf32>
    %81 = vector.broadcast %80 : vector<8x1xf32> to vector<8x8xf32>
    %82 = arith.divf %78, %81 : vector<8x8xf32>
    %83 = vector.extract_strided_slice %25 {offsets = [0, 24], sizes = [8, 8], strides = [1, 1]} : vector<8x32xf32> to vector<8x8xf32>
    %cst_43 = arith.constant dense<0.000000e+00> : vector<8x8xf32>
    %84 = tpu.matmul %82, %83, %cst_43 {dimension_numbers = #tpu.dot_dimension_numbers<[1], [0], [0], [1], [0, 0, 1, 1], [], []>} : vector<8x8xf32>, vector<8x8xf32>, vector<8x8xf32> -> vector<8x8xf32>
    %c0_44 = arith.constant 0 : index
    %c24 = arith.constant 24 : index
    %85 = vector.load %arg9[%c0_44, %c24] : memref<8x32xf32, #tpu.memory_space<vmem>>, vector<8x8xf32>
    tpu.vector_store %arg9[%c0_44, %c24], %84 {strides = array<i32>} : memref<8x32xf32, #tpu.memory_space<vmem>>, vector<8x8xf32>,
    %c0_45 = arith.constant 0 : index
    %c0_46 = arith.constant 0 : index
    %86 = vector.load %arg9[%c0_45, %c0_46] : memref<8x32xf32, #tpu.memory_space<vmem>>, vector<8x32xf32>
    %c0_47 = arith.constant 0 : index
    %c0_48 = arith.constant 0 : index
    %87 = vector.load %arg6[%c0_47, %c0_48] : memref<32x32xf32, #tpu.memory_space<vmem>>, vector<32x32xf32>
    %cst_49 = arith.constant dense<0.000000e+00> : vector<8x32xf32>
    %88 = tpu.matmul %86, %87, %cst_49 {dimension_numbers = #tpu.dot_dimension_numbers<[1], [1], [0], [0], [0, 0, 1, 0], [], []>} : vector<8x32xf32>, vector<32x32xf32>, vector<8x32xf32> -> vector<8x32xf32>
    %c0_50 = arith.constant 0 : index
    %c0_51 = arith.constant 0 : index
    %89 = vector.load %arg7[%c0_50, %c0_51] : memref<1x32xf32, #tpu.memory_space<vmem>>, vector<1x32xf32>
    %90 = vector.broadcast %89 : vector<1x32xf32> to vector<8x32xf32>
    %91 = arith.addf %88, %90 : vector<8x32xf32>
    %92 = vector.shape_cast %91 : vector<8x32xf32> to vector<1x8x32xf32>
    %c0_52 = arith.constant 0 : index
    %c0_53 = arith.constant 0 : index
    %c0_54 = arith.constant 0 : index
    %93 = vector.load %arg8[%c0_52, %c0_53, %c0_54] : memref<1x8x32xf32, #tpu.memory_space<vmem>>, vector<1x8x32xf32>
    tpu.vector_store %arg8[%c0_52, %c0_53, %c0_54], %92 {strides = array<i32>} : memref<1x8x32xf32, #tpu.memory_space<vmem>>, vector<1x8x32xf32>,
    return
  }
  func.func @transform_0(%arg0: i32) -> (i32, i32, i32) {
    %c0_i32 = arith.constant 0 : i32
    %c0_i32_0 = arith.constant 0 : i32
    %c0_i32_1 = arith.constant 0 : i32
    return %arg0, %c0_i32, %c0_i32_0 : i32, i32, i32
  }
  func.func @transform_1(%arg0: i32) -> (i32, i32, i32) {
    %c0_i32 = arith.constant 0 : i32
    %c0_i32_0 = arith.constant 0 : i32
    %c0_i32_1 = arith.constant 0 : i32
    return %arg0, %c0_i32, %c0_i32_0 : i32, i32, i32
  }
  func.func @transform_2(%arg0: i32) -> (i32, i32, i32) {
    %c0_i32 = arith.constant 0 : i32
    %c0_i32_0 = arith.constant 0 : i32
    %c0_i32_1 = arith.constant 0 : i32
    return %arg0, %c0_i32, %c0_i32_0 : i32, i32, i32
  }
  func.func @transform_3(%arg0: i32) -> (i32, i32, i32) {
    %c0_i32 = arith.constant 0 : i32
    %c0_i32_0 = arith.constant 0 : i32
    %c0_i32_1 = arith.constant 0 : i32
    %c0_i32_2 = arith.constant 0 : i32
    return %c0_i32, %c0_i32_0, %c0_i32_1 : i32, i32, i32
  }
  func.func @transform_4(%arg0: i32) -> (i32, i32) {
    %c0_i32 = arith.constant 0 : i32
    %c0_i32_0 = arith.constant 0 : i32
    %c0_i32_1 = arith.constant 0 : i32
    return %c0_i32, %c0_i32_0 : i32, i32
  }
  func.func @transform_5(%arg0: i32) -> (i32, i32) {
    %c0_i32 = arith.constant 0 : i32
    %c0_i32_0 = arith.constant 0 : i32
    %c0_i32_1 = arith.constant 0 : i32
    return %c0_i32, %c0_i32_0 : i32, i32
  }
  func.func @transform_6(%arg0: i32) -> (i32, i32) {
    %c0_i32 = arith.constant 0 : i32
    %c0_i32_0 = arith.constant 0 : i32
    %c0_i32_1 = arith.constant 0 : i32
    return %c0_i32, %c0_i32_0 : i32, i32
  }
  func.func @transform_7(%arg0: i32) -> (i32, i32, i32) {
    %c0_i32 = arith.constant 0 : i32
    %c0_i32_0 = arith.constant 0 : i32
    %c0_i32_1 = arith.constant 0 : i32
    return %arg0, %c0_i32, %c0_i32_0 : i32, i32, i32
  }
}

</mosaic_0001>

<llo_original>
// kernel: tpu_custom_call.1
$region0: #{tpu_custom_call.1}
  #allocation0 [shape = 'u32[]', space=smem, size = 0x4, offset = 0x4, fixed_abs, tag = 'smem constant byte address 0x4 - core index']
  #allocation1 [shape = 'u32[72,128]{1,0:T(1,128)}', space=vmem, size = 0x9000, scoped, tag = 'internal scratch']
  #allocation2 [shape = 'f32[8,32]{1,0:T(8,128)}', space=vmem, size = 0x1000, scoped, tag = 'scratch operand']
  %s0 = inlined_call_operand.hbm [shape: f32[2,8,32], index: 0, kind: input, shape index: {}]
  %s1 = inlined_call_operand.hbm [shape: f32[2,8,32], index: 1, kind: input, shape index: {}]
  %s2 = inlined_call_operand.hbm [shape: f32[2,8,32], index: 2, kind: input, shape index: {}]
  %s3 = inlined_call_operand.hbm [shape: f32[3,32,32], index: 3, kind: input, shape index: {}]
  %s4 = inlined_call_operand.hbm [shape: f32[3,32], index: 4, kind: input, shape index: {}]
  %s5 = inlined_call_operand.hbm [shape: f32[32,32], index: 5, kind: input, shape index: {}]
  %s6 = inlined_call_operand.vmem [shape: f32[1,32], index: 6, kind: input, shape index: {}]
  %s7 = inlined_call_operand.hbm [shape: f32[2,8,32], index: 7, kind: output, shape index: {}]
  %s8 = sld [smem:[#allocation0]]
  $region85: #{tpu_custom_call.1} parent=0
    _
  %s10 = ssub.s32 1, %s8
  %s11 = scalar_select 0, %s10, %s8
  $region1: #{tpu_custom_call.1} parent=0
    #allocation3 [shape = 'u8[8192]{0}', space=vmem, size = 0x2000, scoped, tag = 'input window, operand 0']
    #allocation4 [shape = 's32[2]{0}', space=sflag, size = 0x8, scoped, tag = 'scoped memory for tpu_custom_call.1']
    #allocation5 [shape = 's32[2]{0}', space=sflag, size = 0x8, scoped, tag = 'scoped memory for tpu_custom_call.1']
    #allocation6 [shape = 'u8[8192]{0}', space=vmem, size = 0x2000, scoped, tag = 'input window, operand 1']
    #allocation7 [shape = 's32[2]{0}', space=sflag, size = 0x8, scoped, tag = 'scoped memory for tpu_custom_call.1']
    #allocation8 [shape = 'u8[8192]{0}', space=vmem, size = 0x2000, scoped, tag = 'input window, operand 2']
    #allocation9 [shape = 'u8[49152]{0}', space=vmem, size = 0xc000, scoped, tag = 'input window, operand 3, single buffered']
    #allocation10 [shape = 's32[1]{0}', space=sflag, size = 0x4, scoped, tag = 'scoped memory for tpu_custom_call.1']
    #allocation11 [shape = 'u8[2048]{0}', space=vmem, size = 0x800, scoped, tag = 'input window, operand 4, single buffered']
    #allocation12 [shape = 'u8[16384]{0}', space=vmem, size = 0x4000, scoped, tag = 'input window, operand 5, single buffered']
    #allocation13 [shape = 's32[1]{0}', space=sflag, size = 0x4, scoped, tag = 'scoped memory for tpu_custom_call.1']
    #allocation14 [shape = 'u8[8192]{0}', space=vmem, size = 0x2000, scoped, tag = 'output window, operand 0']
    %12 = vsyncpa [#allocation4], 0
    %s13 = scalar_lea.sflag [#allocation4], 1
    %14 = vsyncpa %s13, 0
    %15 = vsyncpa [#allocation7], 0
    %s16 = scalar_lea.sflag [#allocation7], 1
    %17 = vsyncpa %s16, 0
    %18 = vsyncpa [#allocation10], 0
    %19 = vsyncpa [#allocation13], 0
    %20 = vsyncpa [#allocation5], 0
    %s21 = scalar_lea.sflag [#allocation5], 1
    %22 = vsyncpa %s21, 0
    loop: start=0, step=1, limit=4
    $region2: #{tpu_custom_call.1} parent=1 // loop_pre_header
      _
    $region3: #{tpu_custom_call.1} parent=1 // loop_header
      %s24 = sphi 0, %s28
      %p25 = scmp.ge.s32.totalorder %s24, 4
      %s34 = sphi 0, %s36
      %s37 = sphi 0, %s34
      %s38 = sphi 0, %s37
      %s54 = sphi 0, %s38
      %s60 = sphi 0, %s62
      %s63 = sphi 0, %s60
      %s64 = sphi 0, %s63
      %s80 = sphi 0, %s64
      %s86 = sphi 0, %s88
      %s89 = sphi 0, %s86
      %s90 = sphi 0, %s89
      %s106 = sphi 0, %s90
      %s110 = sphi 0, %s110
      %s112 = sphi 0, %s110
      %s113 = sphi 0, %s112
      %s127 = sphi 0, %s113
      %s131 = sphi 0, %s131
      %s133 = sphi 0, %s131
      %s134 = sphi 0, %s133
      %s148 = sphi 0, %s134
      %s152 = sphi 0, %s152
      %s154 = sphi 0, %s152
      %s155 = sphi 0, %s154
      %s169 = sphi 0, %s155
      %s173 = sphi 0, %s173
      %s175 = sphi 0, %s173
      %s176 = sphi 0, %s175
      %s190 = sphi 0, %s176
      %s196 = sphi 0, %s198
      %s199 = sphi 0, %s196
      %s200 = sphi 0, %s199
      %s216 = sphi 0, %s200
    $region4: #{tpu_custom_call.1} parent=1 // loop_header_branch
      %27 = sbr.rel (%p25) target = $region8
    $region5: #{tpu_custom_call.1} parent=1 // loop_body
      %s29 = ssub.s32 %s24, 1
      %s30 = ssub.s32 %s24, 2
      %s31 = sadd.s32 %s24, 1
      %s32 = ssub.s32 %s24, %s31
      %p33 = scmp.eq.s32.totalorder %s32, 0
      %s35 = sadd.s32 %s34, 1
      %s36 = scalar_select %p33, %s34, %s35
      %p39 = pneg %p33
      %p40 = scmp.eq.s32.totalorder %s24, 1
      %p41 = por %p39, %p40
      %p42 = scmp.ne.s32.totalorder %s34, %s37
      %p43 = scmp.eq.s32.totalorder %s24, 0
      %p44 = por %p42, %p43
      %p45 = scmp.ne.s32.totalorder %s34, %s37
      %p46 = scmp.eq.s32.totalorder %s29, 1
      %p47 = por %p45, %p46
      %p48 = scmp.ne.s32.totalorder %s37, %s38
      %p49 = scmp.eq.s32.totalorder %s29, 0
      %p50 = por %p48, %p49
      %p51 = scmp.ne.s32.totalorder %s37, %s38
      %p52 = scmp.eq.s32.totalorder %s30, 1
      %p53 = por %p51, %p52
      %p55 = scmp.ne.s32.totalorder %s38, %s54
      %p56 = scmp.eq.s32.totalorder %s30, 0
      %p57 = por %p55, %p56
      %s58 = ssub.s32 %s24, %s31
      %p59 = scmp.eq.s32.totalorder %s58, 0
      %s61 = sadd.s32 %s60, 1
      %s62 = scalar_select %p59, %s60, %s61
      %p65 = pneg %p59
      %p66 = scmp.eq.s32.totalorder %s24, 1
      %p67 = por %p65, %p66
      %p68 = scmp.ne.s32.totalorder %s60, %s63
      %p69 = scmp.eq.s32.totalorder %s24, 0
      %p70 = por %p68, %p69
      %p71 = scmp.ne.s32.totalorder %s60, %s63
      %p72 = scmp.eq.s32.totalorder %s29, 1
      %p73 = por %p71, %p72
      %p74 = scmp.ne.s32.totalorder %s63, %s64
      %p75 = scmp.eq.s32.totalorder %s29, 0
      %p76 = por %p74, %p75
      %p77 = scmp.ne.s32.totalorder %s63, %s64
      %p78 = scmp.eq.s32.totalorder %s30, 1
      %p79 = por %p77, %p78
      %p81 = scmp.ne.s32.totalorder %s64, %s80
      %p82 = scmp.eq.s32.totalorder %s30, 0
      %p83 = por %p81, %p82
      %s84 = ssub.s32 %s24, %s31
      %p85 = scmp.eq.s32.totalorder %s84, 0
      %s87 = sadd.s32 %s86, 1
      %s88 = scalar_select %p85, %s86, %s87
      %p91 = pneg %p85
      %p92 = scmp.eq.s32.totalorder %s24, 1
      %p93 = por %p91, %p92
      %p94 = scmp.ne.s32.totalorder %s86, %s89
      %p95 = scmp.eq.s32.totalorder %s24, 0
      %p96 = por %p94, %p95
      %p97 = scmp.ne.s32.totalorder %s86, %s89
      %p98 = scmp.eq.s32.totalorder %s29, 1
      %p99 = por %p97, %p98
      %p100 = scmp.ne.s32.totalorder %s89, %s90
      %p101 = scmp.eq.s32.totalorder %s29, 0
      %p102 = por %p100, %p101
      %p103 = scmp.ne.s32.totalorder %s89, %s90
      %p104 = scmp.eq.s32.totalorder %s30, 1
      %p105 = por %p103, %p104
      %p107 = scmp.ne.s32.totalorder %s90, %s106
      %p108 = scmp.eq.s32.totalorder %s30, 0
      %p109 = por %p107, %p108
      %s111 = sadd.s32 %s110, 1
      %p114 = scmp.eq.s32.totalorder %s24, 1
      %p115 = scmp.ne.s32.totalorder %s110, %s112
      %p116 = scmp.eq.s32.totalorder %s24, 0
      %p117 = por %p115, %p116
      %p118 = scmp.ne.s32.totalorder %s110, %s112
      %p119 = scmp.eq.s32.totalorder %s29, 1
      %p120 = por %p118, %p119
      %p121 = scmp.ne.s32.totalorder %s112, %s113
      %p122 = scmp.eq.s32.totalorder %s29, 0
      %p123 = por %p121, %p122
      %p124 = scmp.ne.s32.totalorder %s112, %s113
      %p125 = scmp.eq.s32.totalorder %s30, 1
      %p126 = por %p124, %p125
      %p128 = scmp.ne.s32.totalorder %s113, %s127
      %p129 = scmp.eq.s32.totalorder %s30, 0
      %p130 = por %p128, %p129
      %s132 = sadd.s32 %s131, 1
      %p135 = scmp.eq.s32.totalorder %s24, 1
      %p136 = scmp.ne.s32.totalorder %s131, %s133
      %p137 = scmp.eq.s32.totalorder %s24, 0
      %p138 = por %p136, %p137
      %p139 = scmp.ne.s32.totalorder %s131, %s133
      %p140 = scmp.eq.s32.totalorder %s29, 1
      %p141 = por %p139, %p140
      %p142 = scmp.ne.s32.totalorder %s133, %s134
      %p143 = scmp.eq.s32.totalorder %s29, 0
      %p144 = por %p142, %p143
      %p145 = scmp.ne.s32.totalorder %s133, %s134
      %p146 = scmp.eq.s32.totalorder %s30, 1
      %p147 = por %p145, %p146
      %p149 = scmp.ne.s32.totalorder %s134, %s148
      %p150 = scmp.eq.s32.totalorder %s30, 0
      %p151 = por %p149, %p150
      %s153 = sadd.s32 %s152, 1
      %p156 = scmp.eq.s32.totalorder %s24, 1
      %p157 = scmp.ne.s32.totalorder %s152, %s154
      %p158 = scmp.eq.s32.totalorder %s24, 0
      %p159 = por %p157, %p158
      %p160 = scmp.ne.s32.totalorder %s152, %s154
      %p161 = scmp.eq.s32.totalorder %s29, 1
      %p162 = por %p160, %p161
      %p163 = scmp.ne.s32.totalorder %s154, %s155
      %p164 = scmp.eq.s32.totalorder %s29, 0
      %p165 = por %p163, %p164
      %p166 = scmp.ne.s32.totalorder %s154, %s155
      %p167 = scmp.eq.s32.totalorder %s30, 1
      %p168 = por %p166, %p167
      %p170 = scmp.ne.s32.totalorder %s155, %s169
      %p171 = scmp.eq.s32.totalorder %s30, 0
      %p172 = por %p170, %p171
      %s174 = sadd.s32 %s173, 1
      %p177 = scmp.eq.s32.totalorder %s24, 1
      %p178 = scmp.ne.s32.totalorder %s173, %s175
      %p179 = scmp.eq.s32.totalorder %s24, 0
      %p180 = por %p178, %p179
      %p181 = scmp.ne.s32.totalorder %s173, %s175
      %p182 = scmp.eq.s32.totalorder %s29, 1
      %p183 = por %p181, %p182
      %p184 = scmp.ne.s32.totalorder %s175, %s176
      %p185 = scmp.eq.s32.totalorder %s29, 0
      %p186 = por %p184, %p185
      %p187 = scmp.ne.s32.totalorder %s175, %s176
      %p188 = scmp.eq.s32.totalorder %s30, 1
      %p189 = por %p187, %p188
      %p191 = scmp.ne.s32.totalorder %s176, %s190
      %p192 = scmp.eq.s32.totalorder %s30, 0
      %p193 = por %p191, %p192
      %s194 = ssub.s32 %s24, %s31
      %p195 = scmp.eq.s32.totalorder %s194, 0
      %s197 = sadd.s32 %s196, 1
      %s198 = scalar_select %p195, %s196, %s197
      %p201 = pneg %p195
      %p202 = scmp.eq.s32.totalorder %s24, 1
      %p203 = por %p201, %p202
      %p204 = scmp.ne.s32.totalorder %s196, %s199
      %p205 = scmp.eq.s32.totalorder %s24, 0
      %p206 = por %p204, %p205
      %p207 = scmp.ne.s32.totalorder %s196, %s199
      %p208 = scmp.eq.s32.totalorder %s29, 1
      %p209 = por %p207, %p208
      %p210 = scmp.ne.s32.totalorder %s199, %s200
      %p211 = scmp.eq.s32.totalorder %s29, 0
      %p212 = por %p210, %p211
      %p213 = scmp.ne.s32.totalorder %s199, %s200
      %p214 = scmp.eq.s32.totalorder %s30, 1
      %p215 = por %p213, %p214
      %p217 = scmp.ne.s32.totalorder %s200, %s216
      %p218 = scmp.eq.s32.totalorder %s30, 0
      %p219 = por %p217, %p218
      %p220 = scmp.le.s32.totalorder 1, %s24
      %p221 = scmp.lt.s32.totalorder %s24, 3
      %p222 = pnand %p220, %p221
      %p223 = pneg %p222
      // Predicated region
      $region9: #{tpu_custom_call.1} parent=5 // pred_check
        _
      $region10: #{tpu_custom_call.1} parent=5 // pred_check_branch
        %225 = sbr.rel (%p222) target = $region12
      $region11: #{tpu_custom_call.1} parent=5 // pred_region
        %s226 = ssub.s32 %s24, 1
        // Predicated region
        $region13: #{tpu_custom_call.1} parent=11 // pred_check
          %p227 = pneg %p123
        $region14: #{tpu_custom_call.1} parent=11 // pred_check_branch
          %229 = sbr.rel (%p227) target = $region16
        $region15: #{tpu_custom_call.1} parent=11 // pred_region
          %231 = vsyncadd [#allocation10], 0
          %s232 = sshll.u32 %s3, 4
          %s233 = int_to_ptr.hbm [resolvable:$true] %s232
          %s234 = sshll.u32 [#allocation9], 4
          %s235 = int_to_ptr.vmem [resolvable:$true] %s234
          %240 = dma.hbm_to_vmem [thread:$0]  %s233, 1536, %s235, [#allocation10], 128, 128, 8
        $region16: #{tpu_custom_call.1} parent=11 // pred_fallthru
          _
        // Predicated region
        $region17: #{tpu_custom_call.1} parent=11 // pred_check
          %p241 = pneg %p144
        $region18: #{tpu_custom_call.1} parent=11 // pred_check_branch
          %243 = sbr.rel (%p241) target = $region20
        $region19: #{tpu_custom_call.1} parent=11 // pred_region
          %245 = vsyncadd [#allocation10], 0
          %s247 = sshll.u32 %s4, 4
          %s248 = int_to_ptr.hbm [resolvable:$true] %s247
          %s249 = sshll.u32 [#allocation11], 4
          %s250 = int_to_ptr.vmem [resolvable:$true] %s249
          %252 = dma.hbm_to_vmem [thread:$0]  %s248, 64, %s250, [#allocation10]
        $region20: #{tpu_custom_call.1} parent=11 // pred_fallthru
          _
        // Predicated region
        $region21: #{tpu_custom_call.1} parent=11 // pred_check
          %p253 = pneg %p165
        $region22: #{tpu_custom_call.1} parent=11 // pred_check_branch
          %255 = sbr.rel (%p253) target = $region24
        $region23: #{tpu_custom_call.1} parent=11 // pred_region
          %257 = vsyncadd [#allocation13], 0
          %s258 = sshll.u32 %s5, 4
          %s259 = int_to_ptr.hbm [resolvable:$true] %s258
          %s260 = sshll.u32 [#allocation12], 4
          %s261 = int_to_ptr.vmem [resolvable:$true] %s260
          %266 = dma.hbm_to_vmem [thread:$0]  %s259, 512, %s261, [#allocation13], 128, 128, 8
        $region24: #{tpu_custom_call.1} parent=11 // pred_fallthru
          _
        // Predicated region
        $region25: #{tpu_custom_call.1} parent=11 // pred_check
          %p267 = pneg %p186
        $region26: #{tpu_custom_call.1} parent=11 // pred_check_branch
          %269 = sbr.rel (%p267) target = $region28
        $region27: #{tpu_custom_call.1} parent=11 // pred_region
          _
        $region28: #{tpu_custom_call.1} parent=11 // pred_fallthru
          _
      $region12: #{tpu_custom_call.1} parent=5 // pred_fallthru
        _
      %p270 = scmp.lt.s32.totalorder %s24, 2
      // Predicated region
      $region29: #{tpu_custom_call.1} parent=5 // pred_check
        %p271 = pneg %p270
      $region30: #{tpu_custom_call.1} parent=5 // pred_check_branch
        %273 = sbr.rel (%p271) target = $region32
      $region31: #{tpu_custom_call.1} parent=5 // pred_region
        // Predicated region
        $region33: #{tpu_custom_call.1} parent=31 // pred_check
          %p274 = pneg %p44
        $region34: #{tpu_custom_call.1} parent=31 // pred_check_branch
          %276 = sbr.rel (%p274) target = $region36
        $region35: #{tpu_custom_call.1} parent=31 // pred_region
          %s277 = sand.u32 %s34, 1
          %s278 = scalar_lea.sflag [#allocation4], %s277
          %s279 = sand.u32 %s34, 1
          %s280 = smul.addr %s279, 8
          %s281 = scalar_lea.vmem [#allocation3], %s280
          %283 = vsyncadd %s278, 0
          %s284 = smul.addr %s24, 8
          %s285 = scalar_lea.hbm %s0, %s284
          %s287 = sshll.u32 %s285, 4
          %s288 = int_to_ptr.hbm [resolvable:$true] %s287
          %s289 = sshll.u32 %s281, 4
          %s290 = int_to_ptr.vmem [resolvable:$true] %s289
          %292 = dma.hbm_to_vmem [thread:$0]  %s288, 128, %s290, %s278
        $region36: #{tpu_custom_call.1} parent=31 // pred_fallthru
          _
        // Predicated region
        $region37: #{tpu_custom_call.1} parent=31 // pred_check
          %p293 = pneg %p70
        $region38: #{tpu_custom_call.1} parent=31 // pred_check_branch
          %295 = sbr.rel (%p293) target = $region40
        $region39: #{tpu_custom_call.1} parent=31 // pred_region
          %s296 = sand.u32 %s24, 1
          %s297 = scalar_lea.sflag [#allocation7], %s296
          %s298 = sand.u32 %s60, 1
          %s299 = smul.addr %s298, 8
          %s300 = scalar_lea.vmem [#allocation6], %s299
          %302 = vsyncadd %s297, 0
          %s303 = smul.addr %s24, 8
          %s304 = scalar_lea.hbm %s1, %s303
          %s306 = sshll.u32 %s304, 4
          %s307 = int_to_ptr.hbm [resolvable:$true] %s306
          %s308 = sshll.u32 %s300, 4
          %s309 = int_to_ptr.vmem [resolvable:$true] %s308
          %311 = dma.hbm_to_vmem [thread:$0]  %s307, 128, %s309, %s297
        $region40: #{tpu_custom_call.1} parent=31 // pred_fallthru
          _
        // Predicated region
        $region41: #{tpu_custom_call.1} parent=31 // pred_check
          %p312 = pneg %p96
        $region42: #{tpu_custom_call.1} parent=31 // pred_check_branch
          %314 = sbr.rel (%p312) target = $region44
        $region43: #{tpu_custom_call.1} parent=31 // pred_region
          %s315 = sand.u32 %s24, 1
          %s316 = scalar_lea.sflag [#allocation7], %s315
          %s317 = sand.u32 %s86, 1
          %s318 = smul.addr %s317, 8
          %s319 = scalar_lea.vmem [#allocation8], %s318
          %321 = vsyncadd %s316, 0
          %s322 = smul.addr %s24, 8
          %s323 = scalar_lea.hbm %s2, %s322
          %s325 = sshll.u32 %s323, 4
          %s326 = int_to_ptr.hbm [resolvable:$true] %s325
          %s327 = sshll.u32 %s319, 4
          %s328 = int_to_ptr.vmem [resolvable:$true] %s327
          %330 = dma.hbm_to_vmem [thread:$0]  %s326, 128, %s328, %s316
        $region44: #{tpu_custom_call.1} parent=31 // pred_fallthru
          _
      $region32: #{tpu_custom_call.1} parent=5 // pred_fallthru
        _
      %p331 = scmp.le.s32.totalorder 1, %s24
      %p332 = scmp.lt.s32.totalorder %s24, 3
      %p333 = pnand %p331, %p332
      %p334 = pneg %p333
      // Predicated region
      $region45: #{tpu_custom_call.1} parent=5 // pred_check
        _
      $region46: #{tpu_custom_call.1} parent=5 // pred_check_branch
        %336 = sbr.rel (%p333) target = $region48
      $region47: #{tpu_custom_call.1} parent=5 // pred_region
        %s337 = ssub.s32 %s24, 1
        %s338 = sand.u32 %s37, 1
        %s339 = scalar_lea.sflag [#allocation4], %s338
        %s340 = sand.u32 %s37, 1
        %s341 = smul.addr %s340, 8
        %s342 = scalar_lea.vmem [#allocation3], %s341
        // Predicated region
        $region49: #{tpu_custom_call.1} parent=47 // pred_check
          %p343 = pneg %p50
        $region50: #{tpu_custom_call.1} parent=47 // pred_check_branch
          %345 = sbr.rel (%p343) target = $region52
        $region51: #{tpu_custom_call.1} parent=47 // pred_region
          %347 = dma.done %s339, 128
        $region52: #{tpu_custom_call.1} parent=47 // pred_fallthru
          _
        %s348 = sand.u32 %s29, 1
        %s349 = scalar_lea.sflag [#allocation7], %s348
        %s350 = sand.u32 %s63, 1
        %s351 = smul.addr %s350, 8
        %s352 = scalar_lea.vmem [#allocation6], %s351
        // Predicated region
        $region53: #{tpu_custom_call.1} parent=47 // pred_check
          %p353 = pneg %p76
        $region54: #{tpu_custom_call.1} parent=47 // pred_check_branch
          %355 = sbr.rel (%p353) target = $region56
        $region55: #{tpu_custom_call.1} parent=47 // pred_region
          %357 = dma.done %s349, 128
        $region56: #{tpu_custom_call.1} parent=47 // pred_fallthru
          _
        %s358 = sand.u32 %s29, 1
        %s359 = scalar_lea.sflag [#allocation7], %s358
        %s360 = sand.u32 %s89, 1
        %s361 = smul.addr %s360, 8
        %s362 = scalar_lea.vmem [#allocation8], %s361
        // Predicated region
        $region57: #{tpu_custom_call.1} parent=47 // pred_check
          %p363 = pneg %p102
        $region58: #{tpu_custom_call.1} parent=47 // pred_check_branch
          %365 = sbr.rel (%p363) target = $region60
        $region59: #{tpu_custom_call.1} parent=47 // pred_region
          %367 = dma.done %s359, 128
        $region60: #{tpu_custom_call.1} parent=47 // pred_fallthru
          _
        // Predicated region
        $region61: #{tpu_custom_call.1} parent=47 // pred_check
          %p368 = pneg %p123
        $region62: #{tpu_custom_call.1} parent=47 // pred_check_branch
          %370 = sbr.rel (%p368) target = $region64
        $region63: #{tpu_custom_call.1} parent=47 // pred_region
          %372 = dma.done [#allocation10], 1536
        $region64: #{tpu_custom_call.1} parent=47 // pred_fallthru
          _
        // Predicated region
        $region65: #{tpu_custom_call.1} parent=47 // pred_check
          %p373 = pneg %p144
        $region66: #{tpu_custom_call.1} parent=47 // pred_check_branch
          %375 = sbr.rel (%p373) target = $region68
        $region67: #{tpu_custom_call.1} parent=47 // pred_region
          %377 = dma.done [#allocation10], 64
        $region68: #{tpu_custom_call.1} parent=47 // pred_fallthru
          _
        // Predicated region
        $region69: #{tpu_custom_call.1} parent=47 // pred_check
          %p378 = pneg %p165
        $region70: #{tpu_custom_call.1} parent=47 // pred_check_branch
          %380 = sbr.rel (%p378) target = $region72
        $region71: #{tpu_custom_call.1} parent=47 // pred_region
          %382 = dma.done [#allocation13], 512
        $region72: #{tpu_custom_call.1} parent=47 // pred_fallthru
          _
        %s383 = sand.u32 %s37, 1
        %s384 = scalar_lea.sflag [#allocation4], %s383
        %s385 = sand.u32 %s37, 1
        %s386 = smul.addr %s385, 8
        %s387 = scalar_lea.vmem [#allocation3], %s386
        %p388 = pneg %p50
        %p389 = pneg %p47
        %s390 = sand.u32 %s29, 1
        %s391 = scalar_lea.sflag [#allocation7], %s390
        %s392 = sand.u32 %s63, 1
        %s393 = smul.addr %s392, 8
        %s394 = scalar_lea.vmem [#allocation6], %s393
        %p395 = pneg %p76
        %p396 = pneg %p73
        %s397 = sand.u32 %s29, 1
        %s398 = scalar_lea.sflag [#allocation7], %s397
        %s399 = sand.u32 %s89, 1
        %s400 = smul.addr %s399, 8
        %s401 = scalar_lea.vmem [#allocation8], %s400
        %p402 = pneg %p102
        %p403 = pneg %p99
        %p404 = pneg %p123
        %p405 = pneg %p120
        %p406 = pneg %p144
        %p407 = pneg %p141
        %p408 = pneg %p165
        %p409 = pneg %p162
        %p410 = pneg %p186
        %p411 = pneg %p183
        %p412 = pneg %p212
        %p413 = pneg %p209
        %s414 = sand.u32 %s199, 1
        %s415 = scalar_lea.sflag [#allocation5], %s414
        %s416 = sand.u32 %s199, 1
        %s417 = smul.addr %s416, 8
        %s418 = scalar_lea.vmem [#allocation14], %s417
        %v419 = vld [vmem:[%s342] sm:$0xff]
        %v420 = vld [vmem:[%s352] sm:$0xff]
        %v421 = vld [vmem:[%s362] sm:$0xff]
        %v422 = vld [vmem:[#allocation9] sm:$0xff]
        %v423 = vld [vmem:[#allocation9 + $0x8] sm:$0xff]
        %v424 = vld [vmem:[#allocation9 + $0x10] sm:$0xff]
        %v425 = vld [vmem:[#allocation9 + $0x18] sm:$0xff]
        %v426 = vld [vmem:[#allocation11] sm:$0x1]
        %v427 = vperm.slane %v426, 0
        %vm428 = vcmask 261120
        %v430 = vsel %vm428, %v419, 0
        %v433 = vsel %vm428, %v422, 0
        %v436 = vsel %vm428, %v423, 0
        %v439 = vsel %vm428, %v424, 0
        %v442 = vsel %vm428, %v425, 0
        %444 = vmatpush.xpose.msra.mxu0 0.0
        %445 = vmatpush.xpose.msra.mxu0 0.0
        %446 = vmatpush.xpose.msra.mxu0 0.0
        %447 = vmatpush.xpose.msra.mxu0 0.0
        %448 = vmatpush.xpose.msra.mxu0 0.0
        %449 = vmatpush.xpose.msra.mxu0 0.0
        %450 = vmatpush.xpose.msra.mxu0 0.0
        %451 = vmatpush.xpose.msra.mxu0 0.0
        %452 = vmatpush.xpose.msra.mxu0 0.0
        %453 = vmatpush.xpose.msra.mxu0 0.0
        %454 = vmatpush.xpose.msra.mxu0 0.0
        %455 = vmatpush.xpose.msra.mxu0 0.0
        %456 = vmatpush.xpose.msra.mxu0 %v442
        %457 = vmatpush.xpose.msra.mxu0 %v439
        %458 = vmatpush.xpose.msra.mxu0 %v436
        %459 = vmatpush.xpose.msra.mxu0 %v433
        %460 = vmatmul.f32.gmra.mxu0 %v430
        %v461 = vpop.f32.mrf.mxu0
        %v462 = vadd.f32 %v427, %v461
        %463 = vdwg.mxu0
        %v464 = vmul.f32 %v462, 0.35355338
        %s465 = scalar_lea.vmem [#allocation9], 32
        %v466 = vld [vmem:[%s465] sm:$0xff]
        %v467 = vld [vmem:[%s465 + $0x8] sm:$0xff]
        %v468 = vld [vmem:[%s465 + $0x10] sm:$0xff]
        %v469 = vld [vmem:[%s465 + $0x18] sm:$0xff]
        %v470 = vld [vmem:[#allocation11 + $0x1] sm:$0x1]
        %v471 = vperm.slane %v470, 0
        %v473 = vsel %vm428, %v420, 0
        %v476 = vsel %vm428, %v466, 0
        %v479 = vsel %vm428, %v467, 0
        %v482 = vsel %vm428, %v468, 0
        %v485 = vsel %vm428, %v469, 0
        %487 = vmatpush.xpose.msra.mxu0 0.0
        %488 = vmatpush.xpose.msra.mxu0 0.0
        %489 = vmatpush.xpose.msra.mxu0 0.0
        %490 = vmatpush.xpose.msra.mxu0 0.0
        %491 = vmatpush.xpose.msra.mxu0 0.0
        %492 = vmatpush.xpose.msra.mxu0 0.0
        %493 = vmatpush.xpose.msra.mxu0 0.0
        %494 = vmatpush.xpose.msra.mxu0 0.0
        %495 = vmatpush.xpose.msra.mxu0 0.0
        %496 = vmatpush.xpose.msra.mxu0 0.0
        %497 = vmatpush.xpose.msra.mxu0 0.0
        %498 = vmatpush.xpose.msra.mxu0 0.0
        %499 = vmatpush.xpose.msra.mxu0 %v485
        %500 = vmatpush.xpose.msra.mxu0 %v482
        %501 = vmatpush.xpose.msra.mxu0 %v479
        %502 = vmatpush.xpose.msra.mxu0 %v476
        %503 = vmatmul.f32.gmra.mxu0 %v473
        %v504 = vpop.f32.mrf.mxu0
        %v505 = vadd.f32 %v471, %v504
        %506 = vdwg.mxu0
        %s507 = scalar_lea.vmem [#allocation9], 64
        %v508 = vld [vmem:[%s507] sm:$0xff]
        %v509 = vld [vmem:[%s507 + $0x8] sm:$0xff]
        %v510 = vld [vmem:[%s507 + $0x10] sm:$0xff]
        %v511 = vld [vmem:[%s507 + $0x18] sm:$0xff]
        %v512 = vld [vmem:[#allocation11 + $0x2] sm:$0x1]
        %v513 = vperm.slane %v512, 0
        %v515 = vsel %vm428, %v421, 0
        %v518 = vsel %vm428, %v508, 0
        %v521 = vsel %vm428, %v509, 0
        %v524 = vsel %vm428, %v510, 0
        %v527 = vsel %vm428, %v511, 0
        %529 = vmatpush.xpose.msra.mxu0 0.0
        %530 = vmatpush.xpose.msra.mxu0 0.0
        %531 = vmatpush.xpose.msra.mxu0 0.0
        %532 = vmatpush.xpose.msra.mxu0 0.0
        %533 = vmatpush.xpose.msra.mxu0 0.0
        %534 = vmatpush.xpose.msra.mxu0 0.0
        %535 = vmatpush.xpose.msra.mxu0 0.0
        %536 = vmatpush.xpose.msra.mxu0 0.0
        %537 = vmatpush.xpose.msra.mxu0 0.0
        %538 = vmatpush.xpose.msra.mxu0 0.0
        %539 = vmatpush.xpose.msra.mxu0 0.0
        %540 = vmatpush.xpose.msra.mxu0 0.0
        %541 = vmatpush.xpose.msra.mxu0 %v527
        %542 = vmatpush.xpose.msra.mxu0 %v524
        %543 = vmatpush.xpose.msra.mxu0 %v521
        %544 = vmatpush.xpose.msra.mxu0 %v518
        %545 = vmatmul.f32.gmra.mxu0 %v515
        %v546 = vpop.f32.mrf.mxu0
        %v547 = vadd.f32 %v513, %v546
        %548 = vdwg.mxu0
        %vm549 = vcmask 64512
        %v551 = vsel %vm549, %v464, 0
        %v554 = vsel %vm549, %v505, 0
        %556 = vmatpush.xpose.msra.mxu0 0.0
        %557 = vmatpush.xpose.msra.mxu0 0.0
        %558 = vmatpush.xpose.msra.mxu0 0.0
        %559 = vmatpush.xpose.msra.mxu0 0.0
        %560 = vmatpush.xpose.msra.mxu0 0.0
        %561 = vmatpush.xpose.msra.mxu0 0.0
        %562 = vmatpush.xpose.msra.mxu0 0.0
        %563 = vmatpush.xpose.msra.mxu0 0.0
        %564 = vmatpush.xpose.msra.mxu0 0.0
        %565 = vmatpush.xpose.msra.mxu0 0.0
        %566 = vmatpush.xpose.msra.mxu0 0.0
        %567 = vmatpush.xpose.msra.mxu0 0.0
        %568 = vmatpush.xpose.msra.mxu0 0.0
        %569 = vmatpush.xpose.msra.mxu0 0.0
        %570 = vmatpush.xpose.msra.mxu0 0.0
        %571 = vmatpush.xpose.msra.mxu0 %v554
        %572 = vmatmul.f32.gmra.mxu0 %v551
        %v573 = vpop.f32.mrf.mxu0
        %v574 = vadd.f32 0.0, %v573
        %575 = vdwg.mxu0
        %v576 = vsel %vm549, %v574, -inf
        %577 = vmax.xlane.f32.xlu0 %v576
        %v578 = vpop.xlane.xlu0 %577
        %v579 = vsub.f32 %v574, %v578
        %v580 = vmul.f32 %v579, 1.442695
        %v581 = vpow.pop %v580
        %v582 = vsel %vm549, %v581, 0.0
        %583 = vadd.xlane.f32.xlu0 %v582
        %v584 = vpop.xlane.xlu0 %583
        %v585 = vrcp.pop %v584
        %v586 = vmul.f32 %v584, %v585
        %v587 = vsub.f32 1.0, %v586
        %v588 = vmul.f32 %v585, %v587
        %v589 = vadd.f32 %v585, %v588
        %vm590 = vweird.f32 %v584
        %vm591 = vweird.f32 %v585
        %vm592 = vmor %vm590, %vm591
        %v593 = vsel %vm592, %v585, %v589
        %v594 = vand.u32 2147483647, %v584
        %vm595 = vcmp.eq.f32.partialorder %v594, 8.507059e+37
        %v596 = vand.u32 %v584, 2147483648
        %v597 = vor.u32 1.1754944e-38, %v596
        %v598 = vsel %vm595, %v597, %v593
        %v599 = vmul.f32 %v581, %v598
        %v601 = vsel %vm549, %v599, 0
        %603 = vmatpush.msra.mxu0 0.0
        %604 = vmatpush.msra.mxu0 0.0
        %605 = vmatpush.msra.mxu0 0.0
        %606 = vmatpush.msra.mxu0 0.0
        %607 = vmatpush.msra.mxu0 0.0
        %608 = vmatpush.msra.mxu0 0.0
        %609 = vmatpush.msra.mxu0 0.0
        %610 = vmatpush.msra.mxu0 0.0
        %611 = vmatpush.msra.mxu0 0.0
        %612 = vmatpush.msra.mxu0 0.0
        %613 = vmatpush.msra.mxu0 0.0
        %614 = vmatpush.msra.mxu0 0.0
        %615 = vmatpush.msra.mxu0 0.0
        %616 = vmatpush.msra.mxu0 0.0
        %617 = vmatpush.msra.mxu0 0.0
        %618 = vmatpush.msra.mxu0 %v547
        %619 = vmatmul.f32.gmra.mxu0 %v601
        %v620 = vpop.f32.mrf.mxu0
        %v621 = vadd.f32 0.0, %v620
        %622 = vdwg.mxu0
        %623 = vst.msk [vmem:[#allocation2] sm:$0xff] %vm549, %v621
        %624 = vrot.lane.b32.xlu0 %v464, 120
        %v625 = vpop.permute.xlu0 %624
        %626 = vrot.lane.b32.xlu0 %v505, 120
        %v627 = vpop.permute.xlu0 %626
        %v628 = vsel %vm549, %v625, 0
        %v630 = vsel %vm549, %v627, 0
        %632 = vmatpush.xpose.msra.mxu0 0.0
        %633 = vmatpush.xpose.msra.mxu0 0.0
        %634 = vmatpush.xpose.msra.mxu0 0.0
        %635 = vmatpush.xpose.msra.mxu0 0.0
        %636 = vmatpush.xpose.msra.mxu0 0.0
        %637 = vmatpush.xpose.msra.mxu0 0.0
        %638 = vmatpush.xpose.msra.mxu0 0.0
        %639 = vmatpush.xpose.msra.mxu0 0.0
        %640 = vmatpush.xpose.msra.mxu0 0.0
        %641 = vmatpush.xpose.msra.mxu0 0.0
        %642 = vmatpush.xpose.msra.mxu0 0.0
        %643 = vmatpush.xpose.msra.mxu0 0.0
        %644 = vmatpush.xpose.msra.mxu0 0.0
        %645 = vmatpush.xpose.msra.mxu0 0.0
        %646 = vmatpush.xpose.msra.mxu0 0.0
        %647 = vmatpush.xpose.msra.mxu0 %v630
        %648 = vmatmul.f32.gmra.mxu0 %v628
        %v649 = vpop.f32.mrf.mxu0
        %v650 = vadd.f32 0.0, %v649
        %651 = vdwg.mxu0
        %v652 = vsel %vm549, %v650, -inf
        %653 = vmax.xlane.f32.xlu0 %v652
        %v654 = vpop.xlane.xlu0 %653
        %v655 = vsub.f32 %v650, %v654
        %v656 = vmul.f32 %v655, 1.442695
        %v657 = vpow.pop %v656
        %v658 = vsel %vm549, %v657, 0.0
        %659 = vadd.xlane.f32.xlu0 %v658
        %v660 = vpop.xlane.xlu0 %659
        %v661 = vrcp.pop %v660
        %v662 = vmul.f32 %v660, %v661
        %v663 = vsub.f32 1.0, %v662
        %v664 = vmul.f32 %v661, %v663
        %v665 = vadd.f32 %v661, %v664
        %vm666 = vweird.f32 %v660
        %vm667 = vweird.f32 %v661
        %vm668 = vmor %vm666, %vm667
        %v669 = vsel %vm668, %v661, %v665
        %v670 = vand.u32 2147483647, %v660
        %vm671 = vcmp.eq.f32.partialorder %v670, 8.507059e+37
        %v672 = vand.u32 %v660, 2147483648
        %v673 = vor.u32 1.1754944e-38, %v672
        %v674 = vsel %vm671, %v673, %v669
        %v675 = vmul.f32 %v657, %v674
        %677 = vrot.lane.b32.xlu0 %v547, 120
        %v678 = vpop.permute.xlu0 %677
        %v681 = vsel %vm549, %v675, 0
        %683 = vmatpush.msra.mxu0 0.0
        %684 = vmatpush.msra.mxu0 0.0
        %685 = vmatpush.msra.mxu0 0.0
        %686 = vmatpush.msra.mxu0 0.0
        %687 = vmatpush.msra.mxu0 0.0
        %688 = vmatpush.msra.mxu0 0.0
        %689 = vmatpush.msra.mxu0 0.0
        %690 = vmatpush.msra.mxu0 0.0
        %691 = vmatpush.msra.mxu0 0.0
        %692 = vmatpush.msra.mxu0 0.0
        %693 = vmatpush.msra.mxu0 0.0
        %694 = vmatpush.msra.mxu0 0.0
        %695 = vmatpush.msra.mxu0 0.0
        %696 = vmatpush.msra.mxu0 0.0
        %697 = vmatpush.msra.mxu0 0.0
        %698 = vmatpush.msra.mxu0 %v678
        %699 = vmatmul.f32.gmra.mxu0 %v681
        %v700 = vpop.f32.mrf.mxu0
        %v701 = vadd.f32 0.0, %v700
        %702 = vdwg.mxu0
        %704 = vrot.lane.b32.xlu0 %v701, 8
        %v705 = vpop.permute.xlu0 %704
        %vm707 = vcmask 130112
        %708 = vst.msk [vmem:[#allocation2] sm:$0xff] %vm707, %v705
        %709 = vrot.lane.b32.xlu0 %v464, 112
        %v710 = vpop.permute.xlu0 %709
        %711 = vrot.lane.b32.xlu0 %v505, 112
        %v712 = vpop.permute.xlu0 %711
        %v713 = vsel %vm549, %v710, 0
        %v715 = vsel %vm549, %v712, 0
        %717 = vmatpush.xpose.msra.mxu0 0.0
        %718 = vmatpush.xpose.msra.mxu0 0.0
        %719 = vmatpush.xpose.msra.mxu0 0.0
        %720 = vmatpush.xpose.msra.mxu0 0.0
        %721 = vmatpush.xpose.msra.mxu0 0.0
        %722 = vmatpush.xpose.msra.mxu0 0.0
        %723 = vmatpush.xpose.msra.mxu0 0.0
        %724 = vmatpush.xpose.msra.mxu0 0.0
        %725 = vmatpush.xpose.msra.mxu0 0.0
        %726 = vmatpush.xpose.msra.mxu0 0.0
        %727 = vmatpush.xpose.msra.mxu0 0.0
        %728 = vmatpush.xpose.msra.mxu0 0.0
        %729 = vmatpush.xpose.msra.mxu0 0.0
        %730 = vmatpush.xpose.msra.mxu0 0.0
        %731 = vmatpush.xpose.msra.mxu0 0.0
        %732 = vmatpush.xpose.msra.mxu0 %v715
        %733 = vmatmul.f32.gmra.mxu0 %v713
        %v734 = vpop.f32.mrf.mxu0
        %v735 = vadd.f32 0.0, %v734
        %736 = vdwg.mxu0
        %v737 = vsel %vm549, %v735, -inf
        %738 = vmax.xlane.f32.xlu0 %v737
        %v739 = vpop.xlane.xlu0 %738
        %v740 = vsub.f32 %v735, %v739
        %v741 = vmul.f32 %v740, 1.442695
        %v742 = vpow.pop %v741
        %v743 = vsel %vm549, %v742, 0.0
        %744 = vadd.xlane.f32.xlu0 %v743
        %v745 = vpop.xlane.xlu0 %744
        %v746 = vrcp.pop %v745
        %v747 = vmul.f32 %v745, %v746
        %v748 = vsub.f32 1.0, %v747
        %v749 = vmul.f32 %v746, %v748
        %v750 = vadd.f32 %v746, %v749
        %vm751 = vweird.f32 %v745
        %vm752 = vweird.f32 %v746
        %vm753 = vmor %vm751, %vm752
        %v754 = vsel %vm753, %v746, %v750
        %v755 = vand.u32 2147483647, %v745
        %vm756 = vcmp.eq.f32.partialorder %v755, 8.507059e+37
        %v757 = vand.u32 %v745, 2147483648
        %v758 = vor.u32 1.1754944e-38, %v757
        %v759 = vsel %vm756, %v758, %v754
        %v760 = vmul.f32 %v742, %v759
        %761 = vrot.lane.b32.xlu0 %v547, 112
        %v762 = vpop.permute.xlu0 %761
        %v765 = vsel %vm549, %v760, 0
        %767 = vmatpush.msra.mxu0 0.0
        %768 = vmatpush.msra.mxu0 0.0
        %769 = vmatpush.msra.mxu0 0.0
        %770 = vmatpush.msra.mxu0 0.0
        %771 = vmatpush.msra.mxu0 0.0
        %772 = vmatpush.msra.mxu0 0.0
        %773 = vmatpush.msra.mxu0 0.0
        %774 = vmatpush.msra.mxu0 0.0
        %775 = vmatpush.msra.mxu0 0.0
        %776 = vmatpush.msra.mxu0 0.0
        %777 = vmatpush.msra.mxu0 0.0
        %778 = vmatpush.msra.mxu0 0.0
        %779 = vmatpush.msra.mxu0 0.0
        %780 = vmatpush.msra.mxu0 0.0
        %781 = vmatpush.msra.mxu0 0.0
        %782 = vmatpush.msra.mxu0 %v762
        %783 = vmatmul.f32.gmra.mxu0 %v765
        %v784 = vpop.f32.mrf.mxu0
        %v785 = vadd.f32 0.0, %v784
        %786 = vdwg.mxu0
        %788 = vrot.lane.b32.xlu0 %v785, 16
        %v789 = vpop.permute.xlu0 %788
        %vm791 = vcmask 195712
        %792 = vst.msk [vmem:[#allocation2] sm:$0xff] %vm791, %v789
        %793 = vrot.lane.b32.xlu0 %v464, 104
        %v794 = vpop.permute.xlu0 %793
        %795 = vrot.lane.b32.xlu0 %v505, 104
        %v796 = vpop.permute.xlu0 %795
        %v797 = vsel %vm549, %v794, 0
        %v799 = vsel %vm549, %v796, 0
        %801 = vmatpush.xpose.msra.mxu0 0.0
        %802 = vmatpush.xpose.msra.mxu0 0.0
        %803 = vmatpush.xpose.msra.mxu0 0.0
        %804 = vmatpush.xpose.msra.mxu0 0.0
        %805 = vmatpush.xpose.msra.mxu0 0.0
        %806 = vmatpush.xpose.msra.mxu0 0.0
        %807 = vmatpush.xpose.msra.mxu0 0.0
        %808 = vmatpush.xpose.msra.mxu0 0.0
        %809 = vmatpush.xpose.msra.mxu0 0.0
        %810 = vmatpush.xpose.msra.mxu0 0.0
        %811 = vmatpush.xpose.msra.mxu0 0.0
        %812 = vmatpush.xpose.msra.mxu0 0.0
        %813 = vmatpush.xpose.msra.mxu0 0.0
        %814 = vmatpush.xpose.msra.mxu0 0.0
        %815 = vmatpush.xpose.msra.mxu0 0.0
        %816 = vmatpush.xpose.msra.mxu0 %v799
        %817 = vmatmul.f32.gmra.mxu0 %v797
        %v818 = vpop.f32.mrf.mxu0
        %v819 = vadd.f32 0.0, %v818
        %820 = vdwg.mxu0
        %v821 = vsel %vm549, %v819, -inf
        %822 = vmax.xlane.f32.xlu0 %v821
        %v823 = vpop.xlane.xlu0 %822
        %v824 = vsub.f32 %v819, %v823
        %v825 = vmul.f32 %v824, 1.442695
        %v826 = vpow.pop %v825
        %v827 = vsel %vm549, %v826, 0.0
        %828 = vadd.xlane.f32.xlu0 %v827
        %v829 = vpop.xlane.xlu0 %828
        %v830 = vrcp.pop %v829
        %v831 = vmul.f32 %v829, %v830
        %v832 = vsub.f32 1.0, %v831
        %v833 = vmul.f32 %v830, %v832
        %v834 = vadd.f32 %v830, %v833
        %vm835 = vweird.f32 %v829
        %vm836 = vweird.f32 %v830
        %vm837 = vmor %vm835, %vm836
        %v838 = vsel %vm837, %v830, %v834
        %v839 = vand.u32 2147483647, %v829
        %vm840 = vcmp.eq.f32.partialorder %v839, 8.507059e+37
        %v841 = vand.u32 %v829, 2147483648
        %v842 = vor.u32 1.1754944e-38, %v841
        %v843 = vsel %vm840, %v842, %v838
        %v844 = vmul.f32 %v826, %v843
        %845 = vrot.lane.b32.xlu0 %v547, 104
        %v846 = vpop.permute.xlu0 %845
        %v849 = vsel %vm549, %v844, 0
        %851 = vmatpush.msra.mxu0 0.0
        %852 = vmatpush.msra.mxu0 0.0
        %853 = vmatpush.msra.mxu0 0.0
        %854 = vmatpush.msra.mxu0 0.0
        %855 = vmatpush.msra.mxu0 0.0
        %856 = vmatpush.msra.mxu0 0.0
        %857 = vmatpush.msra.mxu0 0.0
        %858 = vmatpush.msra.mxu0 0.0
        %859 = vmatpush.msra.mxu0 0.0
        %860 = vmatpush.msra.mxu0 0.0
        %861 = vmatpush.msra.mxu0 0.0
        %862 = vmatpush.msra.mxu0 0.0
        %863 = vmatpush.msra.mxu0 0.0
        %864 = vmatpush.msra.mxu0 0.0
        %865 = vmatpush.msra.mxu0 0.0
        %866 = vmatpush.msra.mxu0 %v846
        %867 = vmatmul.f32.gmra.mxu0 %v849
        %v868 = vpop.f32.mrf.mxu0
        %v869 = vadd.f32 0.0, %v868
        %870 = vdwg.mxu0
        %872 = vrot.lane.b32.xlu0 %v869, 24
        %v873 = vpop.permute.xlu0 %872
        %vm875 = vcmask 261312
        %876 = vst.msk [vmem:[#allocation2] sm:$0xff] %vm875, %v873
        %v877 = vld [vmem:[#allocation2] sm:$0xff]
        %v878 = vld [vmem:[#allocation12] sm:$0xff]
        %v879 = vld [vmem:[#allocation12 + $0x8] sm:$0xff]
        %v880 = vld [vmem:[#allocation12 + $0x10] sm:$0xff]
        %v881 = vld [vmem:[#allocation12 + $0x18] sm:$0xff]
        %v882 = vld [vmem:[%s6] sm:$0x1]
        %v884 = vperm.slane %v882, 0
        %v887 = vsel %vm428, %v877, 0
        %v890 = vsel %vm428, %v878, 0
        %v893 = vsel %vm428, %v879, 0
        %v896 = vsel %vm428, %v880, 0
        %v899 = vsel %vm428, %v881, 0
        %901 = vmatpush.xpose.msra.mxu0 0.0
        %902 = vmatpush.xpose.msra.mxu0 0.0
        %903 = vmatpush.xpose.msra.mxu0 0.0
        %904 = vmatpush.xpose.msra.mxu0 0.0
        %905 = vmatpush.xpose.msra.mxu0 0.0
        %906 = vmatpush.xpose.msra.mxu0 0.0
        %907 = vmatpush.xpose.msra.mxu0 0.0
        %908 = vmatpush.xpose.msra.mxu0 0.0
        %909 = vmatpush.xpose.msra.mxu0 0.0
        %910 = vmatpush.xpose.msra.mxu0 0.0
        %911 = vmatpush.xpose.msra.mxu0 0.0
        %912 = vmatpush.xpose.msra.mxu0 0.0
        %913 = vmatpush.xpose.msra.mxu0 %v899
        %914 = vmatpush.xpose.msra.mxu0 %v896
        %915 = vmatpush.xpose.msra.mxu0 %v893
        %916 = vmatpush.xpose.msra.mxu0 %v890
        %917 = vmatmul.f32.gmra.mxu0 %v887
        %v918 = vpop.f32.mrf.mxu0
        %v919 = vadd.f32 %v884, %v918
        %920 = vdwg.mxu0
        %921 = vst.msk [vmem:[%s418] sm:$0xff] %vm428, %v919
        %s922 = sand.u32 %s199, 1
        %s923 = scalar_lea.sflag [#allocation5], %s922
        %s924 = sand.u32 %s199, 1
        %s925 = smul.addr %s924, 8
        %s926 = scalar_lea.vmem [#allocation14], %s925
        // Predicated region
        $region73: #{tpu_custom_call.1} parent=47 // pred_check
          %p927 = pneg %p209
        $region74: #{tpu_custom_call.1} parent=47 // pred_check_branch
          %929 = sbr.rel (%p927) target = $region76
        $region75: #{tpu_custom_call.1} parent=47 // pred_region
          %931 = vsyncadd %s923, 0
          %s932 = smul.addr %s29, 8
          %s933 = scalar_lea.hbm %s7, %s932
          %s935 = sshll.u32 %s926, 4
          %s936 = int_to_ptr.vmem [resolvable:$true] %s935
          %s937 = sshll.u32 %s933, 4
          %s938 = int_to_ptr.hbm [resolvable:$true] %s937
          %940 = dma.vmem_to_hbm [thread:$0]  %s936, 128, %s938, %s923
        $region76: #{tpu_custom_call.1} parent=47 // pred_fallthru
          _
      $region48: #{tpu_custom_call.1} parent=5 // pred_fallthru
        _
      %p941 = scmp.le.s32.totalorder 2, %s24
      // Predicated region
      $region77: #{tpu_custom_call.1} parent=5 // pred_check
        %p942 = pneg %p941
      $region78: #{tpu_custom_call.1} parent=5 // pred_check_branch
        %944 = sbr.rel (%p942) target = $region80
      $region79: #{tpu_custom_call.1} parent=5 // pred_region
        %s945 = ssub.s32 %s24, 2
        // Predicated region
        $region81: #{tpu_custom_call.1} parent=79 // pred_check
          %p946 = pneg %p215
        $region82: #{tpu_custom_call.1} parent=79 // pred_check_branch
          %948 = sbr.rel (%p946) target = $region84
        $region83: #{tpu_custom_call.1} parent=79 // pred_region
          %s949 = sand.u32 %s200, 1
          %s950 = scalar_lea.sflag [#allocation5], %s949
          %s951 = sand.u32 %s200, 1
          %s952 = smul.addr %s951, 8
          %s953 = scalar_lea.vmem [#allocation14], %s952
          %955 = dma.done %s950, 128
        $region84: #{tpu_custom_call.1} parent=79 // pred_fallthru
          _
      $region80: #{tpu_custom_call.1} parent=5 // pred_fallthru
        _
    $region6: #{tpu_custom_call.1} parent=1 // loop_footer
      %s28 = sadd.s32 1, %s24
    $region7: #{tpu_custom_call.1} parent=1 // loop_footer_branch
      %23 = sbr.rel target = $region3
    $region8: #{tpu_custom_call.1} parent=1 // loop_exit
      _
    %956 = vsyncpa [#allocation4], 1
    %s957 = scalar_lea.sflag [#allocation4], 1
    %958 = vsyncpa %s957, 1
    %959 = vsyncpa [#allocation7], 1
    %s960 = scalar_lea.sflag [#allocation7], 1
    %961 = vsyncpa %s960, 1
    %962 = vsyncpa [#allocation10], 1
    %963 = vsyncpa [#allocation13], 1
    %964 = vsyncpa [#allocation5], 1
    %s965 = scalar_lea.sflag [#allocation5], 1
    %966 = vsyncpa %s965, 1

</llo_original>
